<compile_context>
chip_gen: v6e
topology: v6e:2x2x1
jax: 0.10.0
libtpu: 0.0.40
codegen_flags: <defaults>
</compile_context>

<pallas_src>
import functools

import jax
import jax.numpy as jnp
from jax.experimental import pallas as pl
from jax.experimental.pallas import tpu as pltpu


def _admm_rowslab_kernel(w_ref, x_ref, b_ref, l_ref, u_ref, o_ref, *, tm, idx1, idx2):
    """1-D grid over row tiles; each step does a full-K matmul for a (tm, m) slab."""
    i = pl.program_id(0)

    y = jnp.dot(w_ref[...], x_ref[...], preferred_element_type=jnp.float32)
    y = y + b_ref[...]
    o_ref[...] = y.astype(o_ref.dtype)

    tile_lo = i * tm
    overlaps = (tile_lo < idx2) & (tile_lo + tm > idx1)

    @pl.when(overlaps)
    def _():
        row = jax.lax.broadcasted_iota(jnp.int32, y.shape, 0) + tile_lo
        in_range = (row >= idx1) & (row < idx2)
        clamped = jnp.minimum(jnp.maximum(y, l_ref[...]), u_ref[...])
        o_ref[...] = jnp.where(in_range, clamped, y).astype(o_ref.dtype)


def _admm_tiled_kernel(w_ref, x_ref, b_ref, l_ref, u_ref, o_ref, *, tm, tk, idx1, idx2):
    """2-D grid (row tiles x reduction tiles); accumulates directly into the
    resident output block (its block index is constant along the inner k axis)."""
    i = pl.program_id(0)          # output row tile
    k = pl.program_id(1)          # contraction tile (innermost)

    @pl.when(k == 0)
    def _():
        o_ref[...] = jnp.zeros_like(o_ref)

    # x is fully VMEM-resident; slice out the (tk, m) panel for this k step.
    kk = pl.multiple_of(k * tk, tk)
    x_blk = x_ref[pl.ds(kk, tk), :]
    o_ref[...] += jnp.dot(w_ref[...], x_blk,
                          preferred_element_type=jnp.float32).astype(o_ref.dtype)

    @pl.when(k == pl.num_programs(1) - 1)
    def _():
        y = o_ref[...] + b_ref[...]
        o_ref[...] = y.astype(o_ref.dtype)

        tile_lo = i * tm
        overlaps = (tile_lo < idx2) & (tile_lo + tm > idx1)

        @pl.when(overlaps)
        def _():
            row = jax.lax.broadcasted_iota(jnp.int32, y.shape, 0) + tile_lo
            in_range = (row >= idx1) & (row < idx2)
            clamped = jnp.minimum(jnp.maximum(y, l_ref[...]), u_ref[...])
            o_ref[...] = jnp.where(in_range, clamped, y).astype(o_ref.dtype)


def _round_up(v, mult):
    return ((v + mult - 1) // mult) * mult


def _choose_tiles(n, m, budget_bytes):
    """Pick the largest (tm, tk) W-slab tiling that fits the VMEM budget."""
    lane_m = _round_up(max(m, 1), 128)          # lane-padded batch width
    x_bytes = 2 * n * lane_m * 4                # resident x (with headroom)

    def fits(tm, tk):
        w_bytes = 2 * tm * tk * 4               # double-buffered W slab
        out_bytes = 2 * tm * lane_m * 4         # resident output tile
        blu_bytes = 3 * 2 * tm * 128 * 4        # b, l, u row tiles (lane-padded)
        return w_bytes + out_bytes + blu_bytes + x_bytes <= budget_bytes

    # Row-tile candidates (multiples of 8, or the full dim for small problems).
    tm_cands = [t for t in (512, 256, 128, 64, 32, 16, 8) if t < n and n % t == 0]
    if n <= 1024:
        tm_cands = [n] + tm_cands               # small n: whole rows / whole matrix
    elif not tm_cands:
        tm_cands = [n]

    # Contraction-tile candidates (full K preferred; otherwise multiples of 128).
    tk_cands = [n] + [t for t in (4096, 2048, 1024, 512, 256, 128) if t < n and n % t == 0]

    for tm in tm_cands:
        for tk in tk_cands:
            if fits(tm, tk):
                return tm, tk
    return tm_cands[-1], tk_cands[-1]


def admm_layer(x, W, b, l, u, idx1: int, idx2: int, *, tm=None, tk=None,
               vmem_budget_bytes=40 * 1024 * 1024,
               vmem_limit_bytes=48 * 1024 * 1024):
    """Pallas implementation of ADMM_Layer.forward.

    x: (n, m) f32, W: (n, n) f32, b/l/u: (n, 1) f32. Returns (n, m) f32.
    idx1/idx2 are Python ints (static, as in the TorchScript signature).
    """
    n, m = x.shape
    assert W.shape == (n, n)
    assert b.shape == (n, 1) and l.shape == (n, 1) and u.shape == (n, 1)
    idx1 = max(0, min(int(idx1), n))
    idx2 = max(0, min(int(idx2), n))

    auto_tm, auto_tk = _choose_tiles(n, m, vmem_budget_bytes)
    tm = auto_tm if tm is None else tm
    tk = auto_tk if tk is None else tk
    assert n % tm == 0 and n % tk == 0, (n, tm, tk)

    if tk == n:
        # Full-K row slabs: 1-D grid, no reduction axis, no accumulator carry.
        kernel = functools.partial(_admm_rowslab_kernel, tm=tm, idx1=idx1, idx2=idx2)
        return pl.pallas_call(
            kernel,
            out_shape=jax.ShapeDtypeStruct((n, m), x.dtype),
            grid_spec=pltpu.PrefetchScalarGridSpec(
                num_scalar_prefetch=0,
                grid=(n // tm,),
                in_specs=[
                    pl.BlockSpec((tm, n), lambda i: (i, 0)),   # W row slab
                    pl.BlockSpec((n, m), lambda i: (0, 0)),    # x, fully resident
                    pl.BlockSpec((tm, 1), lambda i: (i, 0)),   # b rows
                    pl.BlockSpec((tm, 1), lambda i: (i, 0)),   # l rows
                    pl.BlockSpec((tm, 1), lambda i: (i, 0)),   # u rows
                ],
                out_specs=pl.BlockSpec((tm, m), lambda i: (i, 0)),
            ),
            compiler_params=pltpu.CompilerParams(
                dimension_semantics=("parallel",),
                vmem_limit_bytes=vmem_limit_bytes),
        )(W, x, b, l, u)

    # 2-D tiled path: rows parallel, reduction axis innermost ("arbitrary").
    kernel = functools.partial(_admm_tiled_kernel, tm=tm, tk=tk, idx1=idx1, idx2=idx2)
    return pl.pallas_call(
        kernel,
        out_shape=jax.ShapeDtypeStruct((n, m), x.dtype),
        grid_spec=pltpu.PrefetchScalarGridSpec(
            num_scalar_prefetch=0,
            grid=(n // tm, n // tk),
            in_specs=[
                pl.BlockSpec((tm, tk), lambda i, k: (i, k)),   # W tile
                pl.BlockSpec((n, m), lambda i, k: (0, 0)),     # x, fully resident
                pl.BlockSpec((tm, 1), lambda i, k: (i, 0)),    # b rows
                pl.BlockSpec((tm, 1), lambda i, k: (i, 0)),    # l rows
                pl.BlockSpec((tm, 1), lambda i, k: (i, 0)),    # u rows
            ],
            out_specs=pl.BlockSpec((tm, m), lambda i, k: (i, 0)),
        ),
        compiler_params=pltpu.CompilerParams(
            dimension_semantics=("parallel", "arbitrary"),
            vmem_limit_bytes=vmem_limit_bytes),
    )(W, x, b, l, u)


if __name__ == "__main__":
    def reference(x, W, b, l, u, idx1, idx2):
        y = W @ x + b
        y = y.at[idx1:idx2].set(jnp.clip(y[idx1:idx2], l[idx1:idx2], u[idx1:idx2]))
        return y

    def make_problem(key, n, m):
        kW, kx, kb, kl, ku = jax.random.split(key, 5)
        W = (jax.random.normal(kW, (n, n), dtype=jnp.float32) / jnp.sqrt(n))
        x = jax.random.normal(kx, (n, m), dtype=jnp.float32)
        b = jax.random.normal(kb, (n, 1), dtype=jnp.float32) * 0.1
        l = -(0.2 + 0.8 * jax.random.uniform(kl, (n, 1), dtype=jnp.float32))
        u = (0.2 + 0.8 * jax.random.uniform(ku, (n, 1), dtype=jnp.float32))
        return W, x, b, l, u

    key = jax.random.PRNGKey(0)
    k1, k2 = jax.random.split(key)

    # 1) Small problem -> auto-dispatch picks the single-grid-step fast path.
    n, m, idx1, idx2 = 256, 8, 64, 192
    W, x, b, l, u = make_problem(k1, n, m)
    out = jax.block_until_ready(admm_layer(x, W, b, l, u, idx1, idx2))
    ref = reference(x, W, b, l, u, idx1, idx2)
    assert jnp.allclose(out, ref, atol=1e-3, rtol=1e-3), float(jnp.max(jnp.abs(out - ref)))

    # 2) Force the 1-D row-slab path with multiple row tiles (clamp straddles tiles).
    n, m, idx1, idx2 = 512, 8, 100, 300
    W, x, b, l, u = make_problem(k2, n, m)
    out = jax.block_until_ready(admm_layer(x, W, b, l, u, idx1, idx2, tm=256, tk=512))
    ref = reference(x, W, b, l, u, idx1, idx2)
    assert jnp.allclose(out, ref, atol=1e-3, rtol=1e-3), float(jnp.max(jnp.abs(out - ref)))

    # 3) Force the 2-D tiled (reduction-axis) path.
    out = jax.block_until_ready(admm_layer(x, W, b, l, u, idx1, idx2, tm=128, tk=256))
    assert jnp.allclose(out, ref, atol=1e-3, rtol=1e-3), float(jnp.max(jnp.abs(out - ref)))

    print("KERNEL_OK")
</pallas_src>

<mosaic_0001>
module attributes {stable_mosaic.version = 11 : i64} {
  func.func @_admm_rowslab_kernel(%arg0: i32, %arg1: memref<256x256xf32, #tpu.memory_space<vmem>>, %arg2: memref<256x8xf32, #tpu.memory_space<vmem>>, %arg3: memref<256x1xf32, #tpu.memory_space<vmem>>, %arg4: memref<256x1xf32, #tpu.memory_space<vmem>>, %arg5: memref<256x1xf32, #tpu.memory_space<vmem>>, %arg6: memref<256x8xf32, #tpu.memory_space<vmem>>) attributes {dimension_semantics = [#tpu.dimension_semantics<parallel>], iteration_bounds = array<i64: 1>, scalar_prefetch = 0 : i64, scratch_operands = 0 : i64, tpu.core_type = #tpu.core_type<tc>, window_params = [{transform_indices = @transform_0, window_bounds = array<i64: 256, 256>}, {pipeline_mode = #tpu.pipeline_mode<synchronous>, transform_indices = @transform_1, window_bounds = array<i64: 256, 8>}, {transform_indices = @transform_2, window_bounds = array<i64: 256, 1>}, {transform_indices = @transform_3, window_bounds = array<i64: 256, 1>}, {transform_indices = @transform_4, window_bounds = array<i64: 256, 1>}, {transform_indices = @transform_5, window_bounds = array<i64: 256, 8>}]} {
    %c0 = arith.constant 0 : index
    %c0_0 = arith.constant 0 : index
    %0 = vector.load %arg1[%c0, %c0_0] : memref<256x256xf32, #tpu.memory_space<vmem>>, vector<256x256xf32>
    %c0_1 = arith.constant 0 : index
    %c0_2 = arith.constant 0 : index
    %1 = vector.load %arg2[%c0_1, %c0_2] : memref<256x8xf32, #tpu.memory_space<vmem>>, vector<256x8xf32>
    %cst = arith.constant dense<0.000000e+00> : vector<256x8xf32>
    %2 = tpu.matmul %0, %1, %cst {dimension_numbers = #tpu.dot_dimension_numbers<[1], [0], [0], [1], [0, 0, 1, 1], [], []>} : vector<256x256xf32>, vector<256x8xf32>, vector<256x8xf32> -> vector<256x8xf32>
    %c0_3 = arith.constant 0 : index
    %c0_4 = arith.constant 0 : index
    %3 = vector.load %arg3[%c0_3, %c0_4] : memref<256x1xf32, #tpu.memory_space<vmem>>, vector<256x1xf32>
    %4 = vector.broadcast %3 : vector<256x1xf32> to vector<256x8xf32>
    %5 = arith.addf %2, %4 : vector<256x8xf32>
    %c0_5 = arith.constant 0 : index
    %c0_6 = arith.constant 0 : index
    %6 = vector.load %arg6[%c0_5, %c0_6] : memref<256x8xf32, #tpu.memory_space<vmem>>, vector<256x8xf32>
    tpu.vector_store %arg6[%c0_5, %c0_6], %5 {strides = array<i32>} : memref<256x8xf32, #tpu.memory_space<vmem>>, vector<256x8xf32>,
    %c256_i32 = arith.constant 256 : i32
    %7 = arith.muli %arg0, %c256_i32 : i32
    %c192_i32 = arith.constant 192 : i32
    %8 = arith.cmpi slt, %7, %c192_i32 : i32
    %c256_i32_7 = arith.constant 256 : i32
    %9 = arith.addi %7, %c256_i32_7 : i32
    %c64_i32 = arith.constant 64 : i32
    %10 = arith.cmpi sgt, %9, %c64_i32 : i32
    %11 = arith.andi %8, %10 : i1
    %12 = arith.extui %11 : i1 to i32
    %c0_i32 = arith.constant 0 : i32
    %13 = arith.cmpi ne, %12, %c0_i32 : i32
    scf.if %13 {
      %14 = tpu.iota {dimensions = array<i32: 0>} : vector<256x8xi32>
      %15 = vector.broadcast %7 : i32 to vector<256x8xi32>
      %16 = arith.addi %14, %15 : vector<256x8xi32>
      %c64_i32_8 = arith.constant 64 : i32
      %17 = vector.broadcast %c64_i32_8 : i32 to vector<256x8xi32>
      %18 = arith.cmpi sge, %16, %17 : vector<256x8xi32>
      %c192_i32_9 = arith.constant 192 : i32
      %19 = vector.broadcast %c192_i32_9 : i32 to vector<256x8xi32>
      %20 = arith.cmpi slt, %16, %19 : vector<256x8xi32>
      %21 = arith.andi %18, %20 : vector<256x8xi1>
      %c0_10 = arith.constant 0 : index
      %c0_11 = arith.constant 0 : index
      %22 = vector.load %arg4[%c0_10, %c0_11] : memref<256x1xf32, #tpu.memory_space<vmem>>, vector<256x1xf32>
      %23 = vector.broadcast %22 : vector<256x1xf32> to vector<256x8xf32>
      %24 = arith.maximumf %5, %23 : vector<256x8xf32>
      %c0_12 = arith.constant 0 : index
      %c0_13 = arith.constant 0 : index
      %25 = vector.load %arg5[%c0_12, %c0_13] : memref<256x1xf32, #tpu.memory_space<vmem>>, vector<256x1xf32>
      %26 = vector.broadcast %25 : vector<256x1xf32> to vector<256x8xf32>
      %27 = arith.minimumf %24, %26 : vector<256x8xf32>
      %28 = arith.select %21, %27, %5 : vector<256x8xi1>, vector<256x8xf32>
      %c0_14 = arith.constant 0 : index
      %c0_15 = arith.constant 0 : index
      %29 = vector.load %arg6[%c0_14, %c0_15] : memref<256x8xf32, #tpu.memory_space<vmem>>, vector<256x8xf32>
      tpu.vector_store %arg6[%c0_14, %c0_15], %28 {strides = array<i32>} : memref<256x8xf32, #tpu.memory_space<vmem>>, vector<256x8xf32>,
    } else {
    }
    return
  }
  func.func @transform_0(%arg0: i32) -> (i32, i32) {
    %c0_i32 = arith.constant 0 : i32
    %c0_i32_0 = arith.constant 0 : i32
    return %arg0, %c0_i32 : i32, i32
  }
  func.func @transform_1(%arg0: i32) -> (i32, i32) {
    %c0_i32 = arith.constant 0 : i32
    %c0_i32_0 = arith.constant 0 : i32
    %c0_i32_1 = arith.constant 0 : i32
    return %c0_i32, %c0_i32_0 : i32, i32
  }
  func.func @transform_2(%arg0: i32) -> (i32, i32) {
    %c0_i32 = arith.constant 0 : i32
    %c0_i32_0 = arith.constant 0 : i32
    return %arg0, %c0_i32 : i32, i32
  }
  func.func @transform_3(%arg0: i32) -> (i32, i32) {
    %c0_i32 = arith.constant 0 : i32
    %c0_i32_0 = arith.constant 0 : i32
    return %arg0, %c0_i32 : i32, i32
  }
  func.func @transform_4(%arg0: i32) -> (i32, i32) {
    %c0_i32 = arith.constant 0 : i32
    %c0_i32_0 = arith.constant 0 : i32
    return %arg0, %c0_i32 : i32, i32
  }
  func.func @transform_5(%arg0: i32) -> (i32, i32) {
    %c0_i32 = arith.constant 0 : i32
    %c0_i32_0 = arith.constant 0 : i32
    return %arg0, %c0_i32 : i32, i32
  }
}

</mosaic_0001>

<llo_original>
// kernel: tpu_custom_call.1
$region0: #{tpu_custom_call.1}
  #allocation0 [shape = 'u32[]', space=smem, size = 0x4, offset = 0x4, fixed_abs, tag = 'smem constant byte address 0x4 - core index']
  #allocation1 [shape = 'u32[144,128]{1,0:T(1,128)}', space=vmem, size = 0x12000, scoped, tag = 'internal scratch']
  %s0 = inlined_call_operand.vmem [shape: f32[256,256], index: 0, kind: input, shape index: {}]
  %s1 = inlined_call_operand.vmem [shape: f32[256,8], index: 1, kind: input, shape index: {}]
  %s2 = inlined_call_operand.vmem [shape: f32[256,1], index: 2, kind: input, shape index: {}]
  %s3 = inlined_call_operand.vmem [shape: f32[256,1], index: 3, kind: input, shape index: {}]
  %s4 = inlined_call_operand.vmem [shape: f32[256,1], index: 4, kind: input, shape index: {}]
  %s5 = inlined_call_operand.vmem [shape: f32[256,8], index: 5, kind: output, shape index: {}]
  %s6 = sld [smem:[#allocation0]]
  $region34: #{tpu_custom_call.1} parent=0
    _
  %s8 = ssub.s32 1, %s6
  %s9 = scalar_select 0, %s8, %s6
  // Predicated region
  $region2: #{tpu_custom_call.1} parent=0 // pred_check
    _
  $region3: #{tpu_custom_call.1} parent=0 // pred_check_branch
    %11 = sbr.rel (0) target = $region5
  $region4: #{tpu_custom_call.1} parent=0 // pred_region
    _
  $region5: #{tpu_custom_call.1} parent=0 // pred_fallthru
    _
  // Predicated region
  $region6: #{tpu_custom_call.1} parent=0 // pred_check
    _
  $region7: #{tpu_custom_call.1} parent=0 // pred_check_branch
    %13 = sbr.rel (0) target = $region9
  $region8: #{tpu_custom_call.1} parent=0 // pred_region
    _
  $region9: #{tpu_custom_call.1} parent=0 // pred_fallthru
    _
  // Predicated region
  $region10: #{tpu_custom_call.1} parent=0 // pred_check
    _
  $region11: #{tpu_custom_call.1} parent=0 // pred_check_branch
    %15 = sbr.rel (0) target = $region13
  $region12: #{tpu_custom_call.1} parent=0 // pred_region
    _
  $region13: #{tpu_custom_call.1} parent=0 // pred_fallthru
    _
  // Predicated region
  $region14: #{tpu_custom_call.1} parent=0 // pred_check
    _
  $region15: #{tpu_custom_call.1} parent=0 // pred_check_branch
    %17 = sbr.rel (0) target = $region17
  $region16: #{tpu_custom_call.1} parent=0 // pred_region
    _
  $region17: #{tpu_custom_call.1} parent=0 // pred_fallthru
    _
  // Predicated region
  $region18: #{tpu_custom_call.1} parent=0 // pred_check
    _
  $region19: #{tpu_custom_call.1} parent=0 // pred_check_branch
    %19 = sbr.rel (0) target = $region21
  $region20: #{tpu_custom_call.1} parent=0 // pred_region
    _
  $region21: #{tpu_custom_call.1} parent=0 // pred_fallthru
    _
  %v20 = vld [vmem:[%s0] sm:$0xff]
  %v21 = vld [vmem:[%s0 + $0x8] sm:$0xff]
  %v22 = vld [vmem:[%s0 + $0x10] sm:$0xff]
  %v23 = vld [vmem:[%s0 + $0x18] sm:$0xff]
  %v24 = vld [vmem:[%s0 + $0x20] sm:$0xff]
  %v25 = vld [vmem:[%s0 + $0x28] sm:$0xff]
  %v26 = vld [vmem:[%s0 + $0x30] sm:$0xff]
  %v27 = vld [vmem:[%s0 + $0x38] sm:$0xff]
  %v28 = vld [vmem:[%s0 + $0x40] sm:$0xff]
  %v29 = vld [vmem:[%s0 + $0x48] sm:$0xff]
  %v30 = vld [vmem:[%s0 + $0x50] sm:$0xff]
  %v31 = vld [vmem:[%s0 + $0x58] sm:$0xff]
  %v32 = vld [vmem:[%s0 + $0x60] sm:$0xff]
  %v33 = vld [vmem:[%s0 + $0x68] sm:$0xff]
  %v34 = vld [vmem:[%s0 + $0x70] sm:$0xff]
  %v35 = vld [vmem:[%s0 + $0x78] sm:$0xff]
  %v36 = vld [vmem:[%s0 + $0x80] sm:$0xff]
  %v37 = vld [vmem:[%s0 + $0x88] sm:$0xff]
  %v38 = vld [vmem:[%s0 + $0x90] sm:$0xff]
  %v39 = vld [vmem:[%s0 + $0x98] sm:$0xff]
  %v40 = vld [vmem:[%s0 + $0xa0] sm:$0xff]
  %v41 = vld [vmem:[%s0 + $0xa8] sm:$0xff]
  %v42 = vld [vmem:[%s0 + $0xb0] sm:$0xff]
  %v43 = vld [vmem:[%s0 + $0xb8] sm:$0xff]
  %v44 = vld [vmem:[%s0 + $0xc0] sm:$0xff]
  %v45 = vld [vmem:[%s0 + $0xc8] sm:$0xff]
  %v46 = vld [vmem:[%s0 + $0xd0] sm:$0xff]
  %v47 = vld [vmem:[%s0 + $0xd8] sm:$0xff]
  %v48 = vld [vmem:[%s0 + $0xe0] sm:$0xff]
  %v49 = vld [vmem:[%s0 + $0xe8] sm:$0xff]
  %v50 = vld [vmem:[%s0 + $0xf0] sm:$0xff]
  %v51 = vld [vmem:[%s0 + $0xf8] sm:$0xff]
  %v52 = vld [vmem:[%s0 + $0x100] sm:$0xff]
  %v53 = vld [vmem:[%s0 + $0x108] sm:$0xff]
  %v54 = vld [vmem:[%s0 + $0x110] sm:$0xff]
  %v55 = vld [vmem:[%s0 + $0x118] sm:$0xff]
  %v56 = vld [vmem:[%s0 + $0x120] sm:$0xff]
  %v57 = vld [vmem:[%s0 + $0x128] sm:$0xff]
  %v58 = vld [vmem:[%s0 + $0x130] sm:$0xff]
  %v59 = vld [vmem:[%s0 + $0x138] sm:$0xff]
  %v60 = vld [vmem:[%s0 + $0x140] sm:$0xff]
  %v61 = vld [vmem:[%s0 + $0x148] sm:$0xff]
  %v62 = vld [vmem:[%s0 + $0x150] sm:$0xff]
  %v63 = vld [vmem:[%s0 + $0x158] sm:$0xff]
  %v64 = vld [vmem:[%s0 + $0x160] sm:$0xff]
  %v65 = vld [vmem:[%s0 + $0x168] sm:$0xff]
  %v66 = vld [vmem:[%s0 + $0x170] sm:$0xff]
  %v67 = vld [vmem:[%s0 + $0x178] sm:$0xff]
  %v68 = vld [vmem:[%s0 + $0x180] sm:$0xff]
  %v69 = vld [vmem:[%s0 + $0x188] sm:$0xff]
  %v70 = vld [vmem:[%s0 + $0x190] sm:$0xff]
  %v71 = vld [vmem:[%s0 + $0x198] sm:$0xff]
  %v72 = vld [vmem:[%s0 + $0x1a0] sm:$0xff]
  %v73 = vld [vmem:[%s0 + $0x1a8] sm:$0xff]
  %v74 = vld [vmem:[%s0 + $0x1b0] sm:$0xff]
  %v75 = vld [vmem:[%s0 + $0x1b8] sm:$0xff]
  %v76 = vld [vmem:[%s0 + $0x1c0] sm:$0xff]
  %v77 = vld [vmem:[%s0 + $0x1c8] sm:$0xff]
  %v78 = vld [vmem:[%s0 + $0x1d0] sm:$0xff]
  %v79 = vld [vmem:[%s0 + $0x1d8] sm:$0xff]
  %v80 = vld [vmem:[%s0 + $0x1e0] sm:$0xff]
  %v81 = vld [vmem:[%s0 + $0x1e8] sm:$0xff]
  %v82 = vld [vmem:[%s0 + $0x1f0] sm:$0xff]
  %v83 = vld [vmem:[%s0 + $0x1f8] sm:$0xff]
  %v84 = vld [vmem:[%s1] sm:$0xff]
  %v85 = vld [vmem:[%s1 + $0x8] sm:$0xff]
  %v86 = vld [vmem:[%s1 + $0x10] sm:$0xff]
  %v87 = vld [vmem:[%s1 + $0x18] sm:$0xff]
  %v88 = vld [vmem:[%s1 + $0x20] sm:$0xff]
  %v89 = vld [vmem:[%s1 + $0x28] sm:$0xff]
  %v90 = vld [vmem:[%s1 + $0x30] sm:$0xff]
  %v91 = vld [vmem:[%s1 + $0x38] sm:$0xff]
  %v92 = vld [vmem:[%s1 + $0x40] sm:$0xff]
  %v93 = vld [vmem:[%s1 + $0x48] sm:$0xff]
  %v94 = vld [vmem:[%s1 + $0x50] sm:$0xff]
  %v95 = vld [vmem:[%s1 + $0x58] sm:$0xff]
  %v96 = vld [vmem:[%s1 + $0x60] sm:$0xff]
  %v97 = vld [vmem:[%s1 + $0x68] sm:$0xff]
  %v98 = vld [vmem:[%s1 + $0x70] sm:$0xff]
  %v99 = vld [vmem:[%s1 + $0x78] sm:$0xff]
  %v100 = vld [vmem:[%s1 + $0x80] sm:$0xff]
  %v101 = vld [vmem:[%s1 + $0x88] sm:$0xff]
  %v102 = vld [vmem:[%s1 + $0x90] sm:$0xff]
  %v103 = vld [vmem:[%s1 + $0x98] sm:$0xff]
  %v104 = vld [vmem:[%s1 + $0xa0] sm:$0xff]
  %v105 = vld [vmem:[%s1 + $0xa8] sm:$0xff]
  %v106 = vld [vmem:[%s1 + $0xb0] sm:$0xff]
  %v107 = vld [vmem:[%s1 + $0xb8] sm:$0xff]
  %v108 = vld [vmem:[%s1 + $0xc0] sm:$0xff]
  %v109 = vld [vmem:[%s1 + $0xc8] sm:$0xff]
  %v110 = vld [vmem:[%s1 + $0xd0] sm:$0xff]
  %v111 = vld [vmem:[%s1 + $0xd8] sm:$0xff]
  %v112 = vld [vmem:[%s1 + $0xe0] sm:$0xff]
  %v113 = vld [vmem:[%s1 + $0xe8] sm:$0xff]
  %v114 = vld [vmem:[%s1 + $0xf0] sm:$0xff]
  %v115 = vld [vmem:[%s1 + $0xf8] sm:$0xff]
  %v116 = vld [vmem:[%s2] sm:$0xff]
  %v117 = vld [vmem:[%s2 + $0x8] sm:$0xff]
  %v118 = vld [vmem:[%s2 + $0x10] sm:$0xff]
  %v119 = vld [vmem:[%s2 + $0x18] sm:$0xff]
  %v120 = vld [vmem:[%s2 + $0x20] sm:$0xff]
  %v121 = vld [vmem:[%s2 + $0x28] sm:$0xff]
  %v122 = vld [vmem:[%s2 + $0x30] sm:$0xff]
  %v123 = vld [vmem:[%s2 + $0x38] sm:$0xff]
  %v124 = vld [vmem:[%s2 + $0x40] sm:$0xff]
  %v125 = vld [vmem:[%s2 + $0x48] sm:$0xff]
  %v126 = vld [vmem:[%s2 + $0x50] sm:$0xff]
  %v127 = vld [vmem:[%s2 + $0x58] sm:$0xff]
  %v128 = vld [vmem:[%s2 + $0x60] sm:$0xff]
  %v129 = vld [vmem:[%s2 + $0x68] sm:$0xff]
  %v130 = vld [vmem:[%s2 + $0x70] sm:$0xff]
  %v131 = vld [vmem:[%s2 + $0x78] sm:$0xff]
  %v132 = vld [vmem:[%s2 + $0x80] sm:$0xff]
  %v133 = vld [vmem:[%s2 + $0x88] sm:$0xff]
  %v134 = vld [vmem:[%s2 + $0x90] sm:$0xff]
  %v135 = vld [vmem:[%s2 + $0x98] sm:$0xff]
  %v136 = vld [vmem:[%s2 + $0xa0] sm:$0xff]
  %v137 = vld [vmem:[%s2 + $0xa8] sm:$0xff]
  %v138 = vld [vmem:[%s2 + $0xb0] sm:$0xff]
  %v139 = vld [vmem:[%s2 + $0xb8] sm:$0xff]
  %v140 = vld [vmem:[%s2 + $0xc0] sm:$0xff]
  %v141 = vld [vmem:[%s2 + $0xc8] sm:$0xff]
  %v142 = vld [vmem:[%s2 + $0xd0] sm:$0xff]
  %v143 = vld [vmem:[%s2 + $0xd8] sm:$0xff]
  %v144 = vld [vmem:[%s2 + $0xe0] sm:$0xff]
  %v145 = vld [vmem:[%s2 + $0xe8] sm:$0xff]
  %v146 = vld [vmem:[%s2 + $0xf0] sm:$0xff]
  %v147 = vld [vmem:[%s2 + $0xf8] sm:$0xff]
  %149 = vset.pattern.permute.xlu0 0
  %150 = vperm.xlu0 %149, %v116
  %v151 = vpop.permute.xlu0 %150
  %154 = vset.pattern.permute.xlu0 0
  %155 = vperm.xlu0 %154, %v117
  %v156 = vpop.permute.xlu0 %155
  %159 = vset.pattern.permute.xlu0 0
  %160 = vperm.xlu0 %159, %v118
  %v161 = vpop.permute.xlu0 %160
  %164 = vset.pattern.permute.xlu0 0
  %165 = vperm.xlu0 %164, %v119
  %v166 = vpop.permute.xlu0 %165
  %169 = vset.pattern.permute.xlu0 0
  %170 = vperm.xlu0 %169, %v120
  %v171 = vpop.permute.xlu0 %170
  %174 = vset.pattern.permute.xlu0 0
  %175 = vperm.xlu0 %174, %v121
  %v176 = vpop.permute.xlu0 %175
  %179 = vset.pattern.permute.xlu0 0
  %180 = vperm.xlu0 %179, %v122
  %v181 = vpop.permute.xlu0 %180
  %184 = vset.pattern.permute.xlu0 0
  %185 = vperm.xlu0 %184, %v123
  %v186 = vpop.permute.xlu0 %185
  %189 = vset.pattern.permute.xlu0 0
  %190 = vperm.xlu0 %189, %v124
  %v191 = vpop.permute.xlu0 %190
  %194 = vset.pattern.permute.xlu0 0
  %195 = vperm.xlu0 %194, %v125
  %v196 = vpop.permute.xlu0 %195
  %199 = vset.pattern.permute.xlu0 0
  %200 = vperm.xlu0 %199, %v126
  %v201 = vpop.permute.xlu0 %200
  %204 = vset.pattern.permute.xlu0 0
  %205 = vperm.xlu0 %204, %v127
  %v206 = vpop.permute.xlu0 %205
  %209 = vset.pattern.permute.xlu0 0
  %210 = vperm.xlu0 %209, %v128
  %v211 = vpop.permute.xlu0 %210
  %214 = vset.pattern.permute.xlu0 0
  %215 = vperm.xlu0 %214, %v129
  %v216 = vpop.permute.xlu0 %215
  %219 = vset.pattern.permute.xlu0 0
  %220 = vperm.xlu0 %219, %v130
  %v221 = vpop.permute.xlu0 %220
  %224 = vset.pattern.permute.xlu0 0
  %225 = vperm.xlu0 %224, %v131
  %v226 = vpop.permute.xlu0 %225
  %229 = vset.pattern.permute.xlu0 0
  %230 = vperm.xlu0 %229, %v132
  %v231 = vpop.permute.xlu0 %230
  %234 = vset.pattern.permute.xlu0 0
  %235 = vperm.xlu0 %234, %v133
  %v236 = vpop.permute.xlu0 %235
  %239 = vset.pattern.permute.xlu0 0
  %240 = vperm.xlu0 %239, %v134
  %v241 = vpop.permute.xlu0 %240
  %244 = vset.pattern.permute.xlu0 0
  %245 = vperm.xlu0 %244, %v135
  %v246 = vpop.permute.xlu0 %245
  %249 = vset.pattern.permute.xlu0 0
  %250 = vperm.xlu0 %249, %v136
  %v251 = vpop.permute.xlu0 %250
  %254 = vset.pattern.permute.xlu0 0
  %255 = vperm.xlu0 %254, %v137
  %v256 = vpop.permute.xlu0 %255
  %259 = vset.pattern.permute.xlu0 0
  %260 = vperm.xlu0 %259, %v138
  %v261 = vpop.permute.xlu0 %260
  %264 = vset.pattern.permute.xlu0 0
  %265 = vperm.xlu0 %264, %v139
  %v266 = vpop.permute.xlu0 %265
  %269 = vset.pattern.permute.xlu0 0
  %270 = vperm.xlu0 %269, %v140
  %v271 = vpop.permute.xlu0 %270
  %274 = vset.pattern.permute.xlu0 0
  %275 = vperm.xlu0 %274, %v141
  %v276 = vpop.permute.xlu0 %275
  %279 = vset.pattern.permute.xlu0 0
  %280 = vperm.xlu0 %279, %v142
  %v281 = vpop.permute.xlu0 %280
  %284 = vset.pattern.permute.xlu0 0
  %285 = vperm.xlu0 %284, %v143
  %v286 = vpop.permute.xlu0 %285
  %289 = vset.pattern.permute.xlu0 0
  %290 = vperm.xlu0 %289, %v144
  %v291 = vpop.permute.xlu0 %290
  %294 = vset.pattern.permute.xlu0 0
  %295 = vperm.xlu0 %294, %v145
  %v296 = vpop.permute.xlu0 %295
  %299 = vset.pattern.permute.xlu0 0
  %300 = vperm.xlu0 %299, %v146
  %v301 = vpop.permute.xlu0 %300
  %304 = vset.pattern.permute.xlu0 0
  %305 = vperm.xlu0 %304, %v147
  %v306 = vpop.permute.xlu0 %305
  %308 = vmatprep.subr.mxu0 0.0
  %309 = vmatpush1.msra.mxu0 %v99
  %310 = vmatprep.subr.mxu0 0.0
  %311 = vmatpush1.msra.mxu0 %v98
  %312 = vmatprep.subr.mxu0 0.0
  %313 = vmatpush1.msra.mxu0 %v97
  %314 = vmatprep.subr.mxu0 0.0
  %315 = vmatpush1.msra.mxu0 %v96
  %316 = vmatprep.subr.mxu0 0.0
  %317 = vmatpush1.msra.mxu0 %v95
  %318 = vmatprep.subr.mxu0 0.0
  %319 = vmatpush1.msra.mxu0 %v94
  %320 = vmatprep.subr.mxu0 0.0
  %321 = vmatpush1.msra.mxu0 %v93
  %322 = vmatprep.subr.mxu0 0.0
  %323 = vmatpush1.msra.mxu0 %v92
  %324 = vmatprep.subr.mxu0 0.0
  %325 = vmatpush1.msra.mxu0 %v91
  %326 = vmatprep.subr.mxu0 0.0
  %327 = vmatpush1.msra.mxu0 %v90
  %328 = vmatprep.subr.mxu0 0.0
  %329 = vmatpush1.msra.mxu0 %v89
  %330 = vmatprep.subr.mxu0 0.0
  %331 = vmatpush1.msra.mxu0 %v88
  %332 = vmatprep.subr.mxu0 0.0
  %333 = vmatpush1.msra.mxu0 %v87
  %334 = vmatprep.subr.mxu0 0.0
  %335 = vmatpush1.msra.mxu0 %v86
  %336 = vmatprep.subr.mxu0 0.0
  %337 = vmatpush1.msra.mxu0 %v85
  %338 = vmatprep.subr.mxu0 0.0
  %339 = vmatpush1.msra.mxu0 %v84
  %340 = vmatprep.subr.mxu0 0.0
  %341 = vmatpush2.msra.mxu0 %v115
  %342 = vmatprep.subr.mxu0 0.0
  %343 = vmatpush2.msra.mxu0 %v114
  %344 = vmatprep.subr.mxu0 0.0
  %345 = vmatpush2.msra.mxu0 %v113
  %346 = vmatprep.subr.mxu0 0.0
  %347 = vmatpush2.msra.mxu0 %v112
  %348 = vmatprep.subr.mxu0 0.0
  %349 = vmatpush2.msra.mxu0 %v111
  %350 = vmatprep.subr.mxu0 0.0
  %351 = vmatpush2.msra.mxu0 %v110
  %352 = vmatprep.subr.mxu0 0.0
  %353 = vmatpush2.msra.mxu0 %v109
  %354 = vmatprep.subr.mxu0 0.0
  %355 = vmatpush2.msra.mxu0 %v108
  %356 = vmatprep.subr.mxu0 0.0
  %357 = vmatpush2.msra.mxu0 %v107
  %358 = vmatprep.subr.mxu0 0.0
  %359 = vmatpush2.msra.mxu0 %v106
  %360 = vmatprep.subr.mxu0 0.0
  %361 = vmatpush2.msra.mxu0 %v105
  %362 = vmatprep.subr.mxu0 0.0
  %363 = vmatpush2.msra.mxu0 %v104
  %364 = vmatprep.subr.mxu0 0.0
  %365 = vmatpush2.msra.mxu0 %v103
  %366 = vmatprep.subr.mxu0 0.0
  %367 = vmatpush2.msra.mxu0 %v102
  %368 = vmatprep.subr.mxu0 0.0
  %369 = vmatpush2.msra.mxu0 %v101
  %370 = vmatprep.subr.mxu0 0.0
  %371 = vmatpush2.msra.mxu0 %v100
  %372 = vmatprep.mubr.f32.mxu0 %v21
  %373 = vmatmul.mubr.f32.gmra.mxu0 %v20
  %v374 = vpop.f32.mrf.mxu0
  %v375 = vadd.f32 %v151, %v374
  %v376 = vpop.f32.mrf.mxu0
  %377 = vmatprep.mubr.f32.mxu0 %v23
  %378 = vmatmul.mubr.f32.gmra.mxu0 %v22
  %v379 = vpop.f32.mrf.mxu0
  %v380 = vadd.f32 %v156, %v379
  %v381 = vpop.f32.mrf.mxu0
  %382 = vmatprep.mubr.f32.mxu0 %v25
  %383 = vmatmul.mubr.f32.gmra.mxu0 %v24
  %v384 = vpop.f32.mrf.mxu0
  %v385 = vadd.f32 %v161, %v384
  %v386 = vpop.f32.mrf.mxu0
  %387 = vmatprep.mubr.f32.mxu0 %v27
  %388 = vmatmul.mubr.f32.gmra.mxu0 %v26
  %v389 = vpop.f32.mrf.mxu0
  %v390 = vadd.f32 %v166, %v389
  %v391 = vpop.f32.mrf.mxu0
  %392 = vmatprep.mubr.f32.mxu0 %v29
  %393 = vmatmul.mubr.f32.gmra.mxu0 %v28
  %v394 = vpop.f32.mrf.mxu0
  %v395 = vadd.f32 %v171, %v394
  %v396 = vpop.f32.mrf.mxu0
  %397 = vmatprep.mubr.f32.mxu0 %v31
  %398 = vmatmul.mubr.f32.gmra.mxu0 %v30
  %v399 = vpop.f32.mrf.mxu0
  %v400 = vadd.f32 %v176, %v399
  %v401 = vpop.f32.mrf.mxu0
  %402 = vmatprep.mubr.f32.mxu0 %v33
  %403 = vmatmul.mubr.f32.gmra.mxu0 %v32
  %v404 = vpop.f32.mrf.mxu0
  %v405 = vadd.f32 %v181, %v404
  %v406 = vpop.f32.mrf.mxu0
  %407 = vmatprep.mubr.f32.mxu0 %v35
  %408 = vmatmul.mubr.f32.gmra.mxu0 %v34
  %v409 = vpop.f32.mrf.mxu0
  %v410 = vadd.f32 %v186, %v409
  %v411 = vpop.f32.mrf.mxu0
  %412 = vmatprep.mubr.f32.mxu0 %v37
  %413 = vmatmul.mubr.f32.gmra.mxu0 %v36
  %v414 = vpop.f32.mrf.mxu0
  %v415 = vadd.f32 %v191, %v414
  %v416 = vpop.f32.mrf.mxu0
  %417 = vmatprep.mubr.f32.mxu0 %v39
  %418 = vmatmul.mubr.f32.gmra.mxu0 %v38
  %v419 = vpop.f32.mrf.mxu0
  %v420 = vadd.f32 %v196, %v419
  %v421 = vpop.f32.mrf.mxu0
  %422 = vmatprep.mubr.f32.mxu0 %v41
  %423 = vmatmul.mubr.f32.gmra.mxu0 %v40
  %v424 = vpop.f32.mrf.mxu0
  %v425 = vadd.f32 %v201, %v424
  %v426 = vpop.f32.mrf.mxu0
  %427 = vmatprep.mubr.f32.mxu0 %v43
  %428 = vmatmul.mubr.f32.gmra.mxu0 %v42
  %v429 = vpop.f32.mrf.mxu0
  %v430 = vadd.f32 %v206, %v429
  %v431 = vpop.f32.mrf.mxu0
  %432 = vmatprep.mubr.f32.mxu0 %v45
  %433 = vmatmul.mubr.f32.gmra.mxu0 %v44
  %v434 = vpop.f32.mrf.mxu0
  %v435 = vadd.f32 %v211, %v434
  %v436 = vpop.f32.mrf.mxu0
  %437 = vmatprep.mubr.f32.mxu0 %v47
  %438 = vmatmul.mubr.f32.gmra.mxu0 %v46
  %v439 = vpop.f32.mrf.mxu0
  %v440 = vadd.f32 %v216, %v439
  %v441 = vpop.f32.mrf.mxu0
  %442 = vmatprep.mubr.f32.mxu0 %v49
  %443 = vmatmul.mubr.f32.gmra.mxu0 %v48
  %v444 = vpop.f32.mrf.mxu0
  %v445 = vadd.f32 %v221, %v444
  %v446 = vpop.f32.mrf.mxu0
  %447 = vmatprep.mubr.f32.mxu0 %v51
  %448 = vmatmul.mubr.f32.gmra.mxu0 %v50
  %v449 = vpop.f32.mrf.mxu0
  %v450 = vadd.f32 %v226, %v449
  %v451 = vpop.f32.mrf.mxu0
  %452 = vmatprep.mubr.f32.mxu0 %v53
  %453 = vmatmul.mubr.f32.gmra.mxu0 %v52
  %v454 = vpop.f32.mrf.mxu0
  %v455 = vadd.f32 %v231, %v454
  %v456 = vpop.f32.mrf.mxu0
  %457 = vmatprep.mubr.f32.mxu0 %v55
  %458 = vmatmul.mubr.f32.gmra.mxu0 %v54
  %v459 = vpop.f32.mrf.mxu0
  %v460 = vadd.f32 %v236, %v459
  %v461 = vpop.f32.mrf.mxu0
  %462 = vmatprep.mubr.f32.mxu0 %v57
  %463 = vmatmul.mubr.f32.gmra.mxu0 %v56
  %v464 = vpop.f32.mrf.mxu0
  %v465 = vadd.f32 %v241, %v464
  %v466 = vpop.f32.mrf.mxu0
  %467 = vmatprep.mubr.f32.mxu0 %v59
  %468 = vmatmul.mubr.f32.gmra.mxu0 %v58
  %v469 = vpop.f32.mrf.mxu0
  %v470 = vadd.f32 %v246, %v469
  %v471 = vpop.f32.mrf.mxu0
  %472 = vmatprep.mubr.f32.mxu0 %v61
  %473 = vmatmul.mubr.f32.gmra.mxu0 %v60
  %v474 = vpop.f32.mrf.mxu0
  %v475 = vadd.f32 %v251, %v474
  %v476 = vpop.f32.mrf.mxu0
  %477 = vmatprep.mubr.f32.mxu0 %v63
  %478 = vmatmul.mubr.f32.gmra.mxu0 %v62
  %v479 = vpop.f32.mrf.mxu0
  %v480 = vadd.f32 %v256, %v479
  %v481 = vpop.f32.mrf.mxu0
  %482 = vmatprep.mubr.f32.mxu0 %v65
  %483 = vmatmul.mubr.f32.gmra.mxu0 %v64
  %v484 = vpop.f32.mrf.mxu0
  %v485 = vadd.f32 %v261, %v484
  %v486 = vpop.f32.mrf.mxu0
  %487 = vmatprep.mubr.f32.mxu0 %v67
  %488 = vmatmul.mubr.f32.gmra.mxu0 %v66
  %v489 = vpop.f32.mrf.mxu0
  %v490 = vadd.f32 %v266, %v489
  %v491 = vpop.f32.mrf.mxu0
  %492 = vmatprep.mubr.f32.mxu0 %v69
  %493 = vmatmul.mubr.f32.gmra.mxu0 %v68
  %v494 = vpop.f32.mrf.mxu0
  %v495 = vadd.f32 %v271, %v494
  %v496 = vpop.f32.mrf.mxu0
  %497 = vmatprep.mubr.f32.mxu0 %v71
  %498 = vmatmul.mubr.f32.gmra.mxu0 %v70
  %v499 = vpop.f32.mrf.mxu0
  %v500 = vadd.f32 %v276, %v499
  %v501 = vpop.f32.mrf.mxu0
  %502 = vmatprep.mubr.f32.mxu0 %v73
  %503 = vmatmul.mubr.f32.gmra.mxu0 %v72
  %v504 = vpop.f32.mrf.mxu0
  %v505 = vadd.f32 %v281, %v504
  %v506 = vpop.f32.mrf.mxu0
  %507 = vmatprep.mubr.f32.mxu0 %v75
  %508 = vmatmul.mubr.f32.gmra.mxu0 %v74
  %v509 = vpop.f32.mrf.mxu0
  %v510 = vadd.f32 %v286, %v509
  %v511 = vpop.f32.mrf.mxu0
  %512 = vmatprep.mubr.f32.mxu0 %v77
  %513 = vmatmul.mubr.f32.gmra.mxu0 %v76
  %v514 = vpop.f32.mrf.mxu0
  %v515 = vadd.f32 %v291, %v514
  %v516 = vpop.f32.mrf.mxu0
  %517 = vmatprep.mubr.f32.mxu0 %v79
  %518 = vmatmul.mubr.f32.gmra.mxu0 %v78
  %v519 = vpop.f32.mrf.mxu0
  %v520 = vadd.f32 %v296, %v519
  %v521 = vpop.f32.mrf.mxu0
  %522 = vmatprep.mubr.f32.mxu0 %v81
  %523 = vmatmul.mubr.f32.gmra.mxu0 %v80
  %v524 = vpop.f32.mrf.mxu0
  %v525 = vadd.f32 %v301, %v524
  %v526 = vpop.f32.mrf.mxu0
  %527 = vmatprep.mubr.f32.mxu0 %v83
  %528 = vmatmul.mubr.f32.gmra.mxu0 %v82
  %v529 = vpop.f32.mrf.mxu0
  %v530 = vadd.f32 %v306, %v529
  %v531 = vpop.f32.mrf.mxu0
  %532 = vdwg.mxu0
  %vm533 = vcmask 64512
  %534 = vst.msk [vmem:[%s5] sm:$0xff] %vm533, %v375
  %535 = vst.msk [vmem:[%s5 + $0x8] sm:$0xff] %vm533, %v380
  %536 = vst.msk [vmem:[%s5 + $0x10] sm:$0xff] %vm533, %v385
  %537 = vst.msk [vmem:[%s5 + $0x18] sm:$0xff] %vm533, %v390
  %538 = vst.msk [vmem:[%s5 + $0x20] sm:$0xff] %vm533, %v395
  %539 = vst.msk [vmem:[%s5 + $0x28] sm:$0xff] %vm533, %v400
  %540 = vst.msk [vmem:[%s5 + $0x30] sm:$0xff] %vm533, %v405
  %541 = vst.msk [vmem:[%s5 + $0x38] sm:$0xff] %vm533, %v410
  %542 = vst.msk [vmem:[%s5 + $0x40] sm:$0xff] %vm533, %v415
  %543 = vst.msk [vmem:[%s5 + $0x48] sm:$0xff] %vm533, %v420
  %544 = vst.msk [vmem:[%s5 + $0x50] sm:$0xff] %vm533, %v425
  %545 = vst.msk [vmem:[%s5 + $0x58] sm:$0xff] %vm533, %v430
  %546 = vst.msk [vmem:[%s5 + $0x60] sm:$0xff] %vm533, %v435
  %547 = vst.msk [vmem:[%s5 + $0x68] sm:$0xff] %vm533, %v440
  %548 = vst.msk [vmem:[%s5 + $0x70] sm:$0xff] %vm533, %v445
  %549 = vst.msk [vmem:[%s5 + $0x78] sm:$0xff] %vm533, %v450
  %550 = vst.msk [vmem:[%s5 + $0x80] sm:$0xff] %vm533, %v455
  %551 = vst.msk [vmem:[%s5 + $0x88] sm:$0xff] %vm533, %v460
  %552 = vst.msk [vmem:[%s5 + $0x90] sm:$0xff] %vm533, %v465
  %553 = vst.msk [vmem:[%s5 + $0x98] sm:$0xff] %vm533, %v470
  %554 = vst.msk [vmem:[%s5 + $0xa0] sm:$0xff] %vm533, %v475
  %555 = vst.msk [vmem:[%s5 + $0xa8] sm:$0xff] %vm533, %v480
  %556 = vst.msk [vmem:[%s5 + $0xb0] sm:$0xff] %vm533, %v485
  %557 = vst.msk [vmem:[%s5 + $0xb8] sm:$0xff] %vm533, %v490
  %558 = vst.msk [vmem:[%s5 + $0xc0] sm:$0xff] %vm533, %v495
  %559 = vst.msk [vmem:[%s5 + $0xc8] sm:$0xff] %vm533, %v500
  %560 = vst.msk [vmem:[%s5 + $0xd0] sm:$0xff] %vm533, %v505
  %561 = vst.msk [vmem:[%s5 + $0xd8] sm:$0xff] %vm533, %v510
  %562 = vst.msk [vmem:[%s5 + $0xe0] sm:$0xff] %vm533, %v515
  %563 = vst.msk [vmem:[%s5 + $0xe8] sm:$0xff] %vm533, %v520
  %564 = vst.msk [vmem:[%s5 + $0xf0] sm:$0xff] %vm533, %v525
  %565 = vst.msk [vmem:[%s5 + $0xf8] sm:$0xff] %vm533, %v530
  %s566 = smul.u32 0, 256
  %p567 = scmp.lt.s32.totalorder %s566, 192
  %s568 = sadd.s32 %s566, 256
  %p569 = scmp.gt.s32.totalorder %s568, 64
  %p570 = pnand %p567, %p569
  %p571 = pneg %p570
  // Predicated region
  $region22: #{tpu_custom_call.1} parent=0 // pred_check
    _
  $region23: #{tpu_custom_call.1} parent=0 // pred_check_branch
    %573 = sbr.rel (%p570) target = $region25
  $region24: #{tpu_custom_call.1} parent=0 // pred_region
    %v574 = vlaneseq
    %v575 = vshrl.u32 %v574, 7
    %v576 = vadd.s32 %v575, 8
    %v577 = vadd.s32 %v575, 16
    %v578 = vadd.s32 %v575, 24
    %v579 = vadd.s32 %v575, 32
    %v580 = vadd.s32 %v575, 40
    %v581 = vadd.s32 %v575, 48
    %v582 = vadd.s32 %v575, 56
    %v583 = vadd.s32 %v575, 64
    %v584 = vadd.s32 %v575, 72
    %v585 = vadd.s32 %v575, 80
    %v586 = vadd.s32 %v575, 88
    %v587 = vadd.s32 %v575, 96
    %v588 = vadd.s32 %v575, 104
    %v589 = vadd.s32 %v575, 112
    %v590 = vadd.s32 %v575, 120
    %v591 = vadd.s32 %v575, 128
    %v592 = vadd.s32 %v575, 136
    %v593 = vadd.s32 %v575, 144
    %v594 = vadd.s32 %v575, 152
    %v595 = vadd.s32 %v575, 160
    %v596 = vadd.s32 %v575, 168
    %v597 = vadd.s32 %v575, 176
    %v598 = vadd.s32 %v575, 184
    %v599 = vadd.s32 %v575, 192
    %v600 = vadd.s32 %v575, 200
    %v601 = vadd.s32 %v575, 208
    %v602 = vadd.s32 %v575, 216
    %v603 = vadd.s32 %v575, 224
    %v604 = vadd.s32 %v575, 232
    %v605 = vadd.s32 %v575, 240
    %v606 = vadd.s32 %v575, 248
    %v607 = vstv %s566
    %v608 = vadd.s32 %v575, %v607
    %v609 = vadd.s32 %v576, %v607
    %v610 = vadd.s32 %v577, %v607
    %v611 = vadd.s32 %v578, %v607
    %v612 = vadd.s32 %v579, %v607
    %v613 = vadd.s32 %v580, %v607
    %v614 = vadd.s32 %v581, %v607
    %v615 = vadd.s32 %v582, %v607
    %v616 = vadd.s32 %v583, %v607
    %v617 = vadd.s32 %v584, %v607
    %v618 = vadd.s32 %v585, %v607
    %v619 = vadd.s32 %v586, %v607
    %v620 = vadd.s32 %v587, %v607
    %v621 = vadd.s32 %v588, %v607
    %v622 = vadd.s32 %v589, %v607
    %v623 = vadd.s32 %v590, %v607
    %v624 = vadd.s32 %v591, %v607
    %v625 = vadd.s32 %v592, %v607
    %v626 = vadd.s32 %v593, %v607
    %v627 = vadd.s32 %v594, %v607
    %v628 = vadd.s32 %v595, %v607
    %v629 = vadd.s32 %v596, %v607
    %v630 = vadd.s32 %v597, %v607
    %v631 = vadd.s32 %v598, %v607
    %v632 = vadd.s32 %v599, %v607
    %v633 = vadd.s32 %v600, %v607
    %v634 = vadd.s32 %v601, %v607
    %v635 = vadd.s32 %v602, %v607
    %v636 = vadd.s32 %v603, %v607
    %v637 = vadd.s32 %v604, %v607
    %v638 = vadd.s32 %v605, %v607
    %v639 = vadd.s32 %v606, %v607
    %vm640 = vcmp.ge.s32.totalorder %v608, 64
    %vm641 = vcmp.ge.s32.totalorder %v609, 64
    %vm642 = vcmp.ge.s32.totalorder %v610, 64
    %vm643 = vcmp.ge.s32.totalorder %v611, 64
    %vm644 = vcmp.ge.s32.totalorder %v612, 64
    %vm645 = vcmp.ge.s32.totalorder %v613, 64
    %vm646 = vcmp.ge.s32.totalorder %v614, 64
    %vm647 = vcmp.ge.s32.totalorder %v615, 64
    %vm648 = vcmp.ge.s32.totalorder %v616, 64
    %vm649 = vcmp.ge.s32.totalorder %v617, 64
    %vm650 = vcmp.ge.s32.totalorder %v618, 64
    %vm651 = vcmp.ge.s32.totalorder %v619, 64
    %vm652 = vcmp.ge.s32.totalorder %v620, 64
    %vm653 = vcmp.ge.s32.totalorder %v621, 64
    %vm654 = vcmp.ge.s32.totalorder %v622, 64
    %vm655 = vcmp.ge.s32.totalorder %v623, 64
    %vm656 = vcmp.ge.s32.totalorder %v624, 64
    %vm657 = vcmp.ge.s32.totalorder %v625, 64
    %vm658 = vcmp.ge.s32.totalorder %v626, 64
    %vm659 = vcmp.ge.s32.totalorder %v627, 64
    %vm660 = vcmp.ge.s32.totalorder %v628, 64
    %vm661 = vcmp.ge.s32.totalorder %v629, 64
    %vm662 = vcmp.ge.s32.totalorder %v630, 64
    %vm663 = vcmp.ge.s32.totalorder %v631, 64
    %vm664 = vcmp.ge.s32.totalorder %v632, 64
    %vm665 = vcmp.ge.s32.totalorder %v633, 64
    %vm666 = vcmp.ge.s32.totalorder %v634, 64
    %vm667 = vcmp.ge.s32.totalorder %v635, 64
    %vm668 = vcmp.ge.s32.totalorder %v636, 64
    %vm669 = vcmp.ge.s32.totalorder %v637, 64
    %vm670 = vcmp.ge.s32.totalorder %v638, 64
    %vm671 = vcmp.ge.s32.totalorder %v639, 64
    %vm672 = vcmp.lt.s32.totalorder %v608, 192
    %vm673 = vcmp.lt.s32.totalorder %v609, 192
    %vm674 = vcmp.lt.s32.totalorder %v610, 192
    %vm675 = vcmp.lt.s32.totalorder %v611, 192
    %vm676 = vcmp.lt.s32.totalorder %v612, 192
    %vm677 = vcmp.lt.s32.totalorder %v613, 192
    %vm678 = vcmp.lt.s32.totalorder %v614, 192
    %vm679 = vcmp.lt.s32.totalorder %v615, 192
    %vm680 = vcmp.lt.s32.totalorder %v616, 192
    %vm681 = vcmp.lt.s32.totalorder %v617, 192
    %vm682 = vcmp.lt.s32.totalorder %v618, 192
    %vm683 = vcmp.lt.s32.totalorder %v619, 192
    %vm684 = vcmp.lt.s32.totalorder %v620, 192
    %vm685 = vcmp.lt.s32.totalorder %v621, 192
    %vm686 = vcmp.lt.s32.totalorder %v622, 192
    %vm687 = vcmp.lt.s32.totalorder %v623, 192
    %vm688 = vcmp.lt.s32.totalorder %v624, 192
    %vm689 = vcmp.lt.s32.totalorder %v625, 192
    %vm690 = vcmp.lt.s32.totalorder %v626, 192
    %vm691 = vcmp.lt.s32.totalorder %v627, 192
    %vm692 = vcmp.lt.s32.totalorder %v628, 192
    %vm693 = vcmp.lt.s32.totalorder %v629, 192
    %vm694 = vcmp.lt.s32.totalorder %v630, 192
    %vm695 = vcmp.lt.s32.totalorder %v631, 192
    %vm696 = vcmp.lt.s32.totalorder %v632, 192
    %vm697 = vcmp.lt.s32.totalorder %v633, 192
    %vm698 = vcmp.lt.s32.totalorder %v634, 192
    %vm699 = vcmp.lt.s32.totalorder %v635, 192
    %vm700 = vcmp.lt.s32.totalorder %v636, 192
    %vm701 = vcmp.lt.s32.totalorder %v637, 192
    %vm702 = vcmp.lt.s32.totalorder %v638, 192
    %vm703 = vcmp.lt.s32.totalorder %v639, 192
    %vm704 = vmand %vm640, %vm672
    %vm705 = vmand %vm641, %vm673
    %vm706 = vmand %vm642, %vm674
    %vm707 = vmand %vm643, %vm675
    %vm708 = vmand %vm644, %vm676
    %vm709 = vmand %vm645, %vm677
    %vm710 = vmand %vm646, %vm678
    %vm711 = vmand %vm647, %vm679
    %vm712 = vmand %vm648, %vm680
    %vm713 = vmand %vm649, %vm681
    %vm714 = vmand %vm650, %vm682
    %vm715 = vmand %vm651, %vm683
    %vm716 = vmand %vm652, %vm684
    %vm717 = vmand %vm653, %vm685
    %vm718 = vmand %vm654, %vm686
    %vm719 = vmand %vm655, %vm687
    %vm720 = vmand %vm656, %vm688
    %vm721 = vmand %vm657, %vm689
    %vm722 = vmand %vm658, %vm690
    %vm723 = vmand %vm659, %vm691
    %vm724 = vmand %vm660, %vm692
    %vm725 = vmand %vm661, %vm693
    %vm726 = vmand %vm662, %vm694
    %vm727 = vmand %vm663, %vm695
    %vm728 = vmand %vm664, %vm696
    %vm729 = vmand %vm665, %vm697
    %vm730 = vmand %vm666, %vm698
    %vm731 = vmand %vm667, %vm699
    %vm732 = vmand %vm668, %vm700
    %vm733 = vmand %vm669, %vm701
    %vm734 = vmand %vm670, %vm702
    %vm735 = vmand %vm671, %vm703
    %v736 = vld [vmem:[%s3] sm:$0xff]
    %v737 = vld [vmem:[%s3 + $0x8] sm:$0xff]
    %v738 = vld [vmem:[%s3 + $0x10] sm:$0xff]
    %v739 = vld [vmem:[%s3 + $0x18] sm:$0xff]
    %v740 = vld [vmem:[%s3 + $0x20] sm:$0xff]
    %v741 = vld [vmem:[%s3 + $0x28] sm:$0xff]
    %v742 = vld [vmem:[%s3 + $0x30] sm:$0xff]
    %v743 = vld [vmem:[%s3 + $0x38] sm:$0xff]
    %v744 = vld [vmem:[%s3 + $0x40] sm:$0xff]
    %v745 = vld [vmem:[%s3 + $0x48] sm:$0xff]
    %v746 = vld [vmem:[%s3 + $0x50] sm:$0xff]
    %v747 = vld [vmem:[%s3 + $0x58] sm:$0xff]
    %v748 = vld [vmem:[%s3 + $0x60] sm:$0xff]
    %v749 = vld [vmem:[%s3 + $0x68] sm:$0xff]
    %v750 = vld [vmem:[%s3 + $0x70] sm:$0xff]
    %v751 = vld [vmem:[%s3 + $0x78] sm:$0xff]
    %v752 = vld [vmem:[%s3 + $0x80] sm:$0xff]
    %v753 = vld [vmem:[%s3 + $0x88] sm:$0xff]
    %v754 = vld [vmem:[%s3 + $0x90] sm:$0xff]
    %v755 = vld [vmem:[%s3 + $0x98] sm:$0xff]
    %v756 = vld [vmem:[%s3 + $0xa0] sm:$0xff]
    %v757 = vld [vmem:[%s3 + $0xa8] sm:$0xff]
    %v758 = vld [vmem:[%s3 + $0xb0] sm:$0xff]
    %v759 = vld [vmem:[%s3 + $0xb8] sm:$0xff]
    %v760 = vld [vmem:[%s3 + $0xc0] sm:$0xff]
    %v761 = vld [vmem:[%s3 + $0xc8] sm:$0xff]
    %v762 = vld [vmem:[%s3 + $0xd0] sm:$0xff]
    %v763 = vld [vmem:[%s3 + $0xd8] sm:$0xff]
    %v764 = vld [vmem:[%s3 + $0xe0] sm:$0xff]
    %v765 = vld [vmem:[%s3 + $0xe8] sm:$0xff]
    %v766 = vld [vmem:[%s3 + $0xf0] sm:$0xff]
    %v767 = vld [vmem:[%s3 + $0xf8] sm:$0xff]
    %769 = vset.pattern.permute.xlu0 0
    %770 = vperm.xlu0 %769, %v736
    %v771 = vpop.permute.xlu0 %770
    %774 = vset.pattern.permute.xlu0 0
    %775 = vperm.xlu0 %774, %v737
    %v776 = vpop.permute.xlu0 %775
    %779 = vset.pattern.permute.xlu0 0
    %780 = vperm.xlu0 %779, %v738
    %v781 = vpop.permute.xlu0 %780
    %784 = vset.pattern.permute.xlu0 0
    %785 = vperm.xlu0 %784, %v739
    %v786 = vpop.permute.xlu0 %785
    %789 = vset.pattern.permute.xlu0 0
    %790 = vperm.xlu0 %789, %v740
    %v791 = vpop.permute.xlu0 %790
    %794 = vset.pattern.permute.xlu0 0
    %795 = vperm.xlu0 %794, %v741
    %v796 = vpop.permute.xlu0 %795
    %799 = vset.pattern.permute.xlu0 0
    %800 = vperm.xlu0 %799, %v742
    %v801 = vpop.permute.xlu0 %800
    %804 = vset.pattern.permute.xlu0 0
    %805 = vperm.xlu0 %804, %v743
    %v806 = vpop.permute.xlu0 %805
    %809 = vset.pattern.permute.xlu0 0
    %810 = vperm.xlu0 %809, %v744
    %v811 = vpop.permute.xlu0 %810
    %814 = vset.pattern.permute.xlu0 0
    %815 = vperm.xlu0 %814, %v745
    %v816 = vpop.permute.xlu0 %815
    %819 = vset.pattern.permute.xlu0 0
    %820 = vperm.xlu0 %819, %v746
    %v821 = vpop.permute.xlu0 %820
    %824 = vset.pattern.permute.xlu0 0
    %825 = vperm.xlu0 %824, %v747
    %v826 = vpop.permute.xlu0 %825
    %829 = vset.pattern.permute.xlu0 0
    %830 = vperm.xlu0 %829, %v748
    %v831 = vpop.permute.xlu0 %830
    %834 = vset.pattern.permute.xlu0 0
    %835 = vperm.xlu0 %834, %v749
    %v836 = vpop.permute.xlu0 %835
    %839 = vset.pattern.permute.xlu0 0
    %840 = vperm.xlu0 %839, %v750
    %v841 = vpop.permute.xlu0 %840
    %844 = vset.pattern.permute.xlu0 0
    %845 = vperm.xlu0 %844, %v751
    %v846 = vpop.permute.xlu0 %845
    %849 = vset.pattern.permute.xlu0 0
    %850 = vperm.xlu0 %849, %v752
    %v851 = vpop.permute.xlu0 %850
    %854 = vset.pattern.permute.xlu0 0
    %855 = vperm.xlu0 %854, %v753
    %v856 = vpop.permute.xlu0 %855
    %859 = vset.pattern.permute.xlu0 0
    %860 = vperm.xlu0 %859, %v754
    %v861 = vpop.permute.xlu0 %860
    %864 = vset.pattern.permute.xlu0 0
    %865 = vperm.xlu0 %864, %v755
    %v866 = vpop.permute.xlu0 %865
    %869 = vset.pattern.permute.xlu0 0
    %870 = vperm.xlu0 %869, %v756
    %v871 = vpop.permute.xlu0 %870
    %874 = vset.pattern.permute.xlu0 0
    %875 = vperm.xlu0 %874, %v757
    %v876 = vpop.permute.xlu0 %875
    %879 = vset.pattern.permute.xlu0 0
    %880 = vperm.xlu0 %879, %v758
    %v881 = vpop.permute.xlu0 %880
    %884 = vset.pattern.permute.xlu0 0
    %885 = vperm.xlu0 %884, %v759
    %v886 = vpop.permute.xlu0 %885
    %889 = vset.pattern.permute.xlu0 0
    %890 = vperm.xlu0 %889, %v760
    %v891 = vpop.permute.xlu0 %890
    %894 = vset.pattern.permute.xlu0 0
    %895 = vperm.xlu0 %894, %v761
    %v896 = vpop.permute.xlu0 %895
    %899 = vset.pattern.permute.xlu0 0
    %900 = vperm.xlu0 %899, %v762
    %v901 = vpop.permute.xlu0 %900
    %904 = vset.pattern.permute.xlu0 0
    %905 = vperm.xlu0 %904, %v763
    %v906 = vpop.permute.xlu0 %905
    %909 = vset.pattern.permute.xlu0 0
    %910 = vperm.xlu0 %909, %v764
    %v911 = vpop.permute.xlu0 %910
    %914 = vset.pattern.permute.xlu0 0
    %915 = vperm.xlu0 %914, %v765
    %v916 = vpop.permute.xlu0 %915
    %919 = vset.pattern.permute.xlu0 0
    %920 = vperm.xlu0 %919, %v766
    %v921 = vpop.permute.xlu0 %920
    %924 = vset.pattern.permute.xlu0 0
    %925 = vperm.xlu0 %924, %v767
    %v926 = vpop.permute.xlu0 %925
    %v928 = vmax.f32 %v375, %v771
    %v929 = vmax.f32 %v380, %v776
    %v930 = vmax.f32 %v385, %v781
    %v931 = vmax.f32 %v390, %v786
    %v932 = vmax.f32 %v395, %v791
    %v933 = vmax.f32 %v400, %v796
    %v934 = vmax.f32 %v405, %v801
    %v935 = vmax.f32 %v410, %v806
    %v936 = vmax.f32 %v415, %v811
    %v937 = vmax.f32 %v420, %v816
    %v938 = vmax.f32 %v425, %v821
    %v939 = vmax.f32 %v430, %v826
    %v940 = vmax.f32 %v435, %v831
    %v941 = vmax.f32 %v440, %v836
    %v942 = vmax.f32 %v445, %v841
    %v943 = vmax.f32 %v450, %v846
    %v944 = vmax.f32 %v455, %v851
    %v945 = vmax.f32 %v460, %v856
    %v946 = vmax.f32 %v465, %v861
    %v947 = vmax.f32 %v470, %v866
    %v948 = vmax.f32 %v475, %v871
    %v949 = vmax.f32 %v480, %v876
    %v950 = vmax.f32 %v485, %v881
    %v951 = vmax.f32 %v490, %v886
    %v952 = vmax.f32 %v495, %v891
    %v953 = vmax.f32 %v500, %v896
    %v954 = vmax.f32 %v505, %v901
    %v955 = vmax.f32 %v510, %v906
    %v956 = vmax.f32 %v515, %v911
    %v957 = vmax.f32 %v520, %v916
    %v958 = vmax.f32 %v525, %v921
    %v959 = vmax.f32 %v530, %v926
    %v960 = vld [vmem:[%s4] sm:$0xff]
    %v961 = vld [vmem:[%s4 + $0x8] sm:$0xff]
    %v962 = vld [vmem:[%s4 + $0x10] sm:$0xff]
    %v963 = vld [vmem:[%s4 + $0x18] sm:$0xff]
    %v964 = vld [vmem:[%s4 + $0x20] sm:$0xff]
    %v965 = vld [vmem:[%s4 + $0x28] sm:$0xff]
    %v966 = vld [vmem:[%s4 + $0x30] sm:$0xff]
    %v967 = vld [vmem:[%s4 + $0x38] sm:$0xff]
    %v968 = vld [vmem:[%s4 + $0x40] sm:$0xff]
    %v969 = vld [vmem:[%s4 + $0x48] sm:$0xff]
    %v970 = vld [vmem:[%s4 + $0x50] sm:$0xff]
    %v971 = vld [vmem:[%s4 + $0x58] sm:$0xff]
    %v972 = vld [vmem:[%s4 + $0x60] sm:$0xff]
    %v973 = vld [vmem:[%s4 + $0x68] sm:$0xff]
    %v974 = vld [vmem:[%s4 + $0x70] sm:$0xff]
    %v975 = vld [vmem:[%s4 + $0x78] sm:$0xff]
    %v976 = vld [vmem:[%s4 + $0x80] sm:$0xff]
    %v977 = vld [vmem:[%s4 + $0x88] sm:$0xff]
    %v978 = vld [vmem:[%s4 + $0x90] sm:$0xff]
    %v979 = vld [vmem:[%s4 + $0x98] sm:$0xff]
    %v980 = vld [vmem:[%s4 + $0xa0] sm:$0xff]
    %v981 = vld [vmem:[%s4 + $0xa8] sm:$0xff]
    %v982 = vld [vmem:[%s4 + $0xb0] sm:$0xff]
    %v983 = vld [vmem:[%s4 + $0xb8] sm:$0xff]
    %v984 = vld [vmem:[%s4 + $0xc0] sm:$0xff]
    %v985 = vld [vmem:[%s4 + $0xc8] sm:$0xff]
    %v986 = vld [vmem:[%s4 + $0xd0] sm:$0xff]
    %v987 = vld [vmem:[%s4 + $0xd8] sm:$0xff]
    %v988 = vld [vmem:[%s4 + $0xe0] sm:$0xff]
    %v989 = vld [vmem:[%s4 + $0xe8] sm:$0xff]
    %v990 = vld [vmem:[%s4 + $0xf0] sm:$0xff]
    %v991 = vld [vmem:[%s4 + $0xf8] sm:$0xff]
    %993 = vset.pattern.permute.xlu0 0
    %994 = vperm.xlu0 %993, %v960
    %v995 = vpop.permute.xlu0 %994
    %998 = vset.pattern.permute.xlu0 0
    %999 = vperm.xlu0 %998, %v961
    %v1000 = vpop.permute.xlu0 %999
    %1003 = vset.pattern.permute.xlu0 0
    %1004 = vperm.xlu0 %1003, %v962
    %v1005 = vpop.permute.xlu0 %1004
    %1008 = vset.pattern.permute.xlu0 0
    %1009 = vperm.xlu0 %1008, %v963
    %v1010 = vpop.permute.xlu0 %1009
    %1013 = vset.pattern.permute.xlu0 0
    %1014 = vperm.xlu0 %1013, %v964
    %v1015 = vpop.permute.xlu0 %1014
    %1018 = vset.pattern.permute.xlu0 0
    %1019 = vperm.xlu0 %1018, %v965
    %v1020 = vpop.permute.xlu0 %1019
    %1023 = vset.pattern.permute.xlu0 0
    %1024 = vperm.xlu0 %1023, %v966
    %v1025 = vpop.permute.xlu0 %1024
    %1028 = vset.pattern.permute.xlu0 0
    %1029 = vperm.xlu0 %1028, %v967
    %v1030 = vpop.permute.xlu0 %1029
    %1033 = vset.pattern.permute.xlu0 0
    %1034 = vperm.xlu0 %1033, %v968
    %v1035 = vpop.permute.xlu0 %1034
    %1038 = vset.pattern.permute.xlu0 0
    %1039 = vperm.xlu0 %1038, %v969
    %v1040 = vpop.permute.xlu0 %1039
    %1043 = vset.pattern.permute.xlu0 0
    %1044 = vperm.xlu0 %1043, %v970
    %v1045 = vpop.permute.xlu0 %1044
    %1048 = vset.pattern.permute.xlu0 0
    %1049 = vperm.xlu0 %1048, %v971
    %v1050 = vpop.permute.xlu0 %1049
    %1053 = vset.pattern.permute.xlu0 0
    %1054 = vperm.xlu0 %1053, %v972
    %v1055 = vpop.permute.xlu0 %1054
    %1058 = vset.pattern.permute.xlu0 0
    %1059 = vperm.xlu0 %1058, %v973
    %v1060 = vpop.permute.xlu0 %1059
    %1063 = vset.pattern.permute.xlu0 0
    %1064 = vperm.xlu0 %1063, %v974
    %v1065 = vpop.permute.xlu0 %1064
    %1068 = vset.pattern.permute.xlu0 0
    %1069 = vperm.xlu0 %1068, %v975
    %v1070 = vpop.permute.xlu0 %1069
    %1073 = vset.pattern.permute.xlu0 0
    %1074 = vperm.xlu0 %1073, %v976
    %v1075 = vpop.permute.xlu0 %1074
    %1078 = vset.pattern.permute.xlu0 0
    %1079 = vperm.xlu0 %1078, %v977
    %v1080 = vpop.permute.xlu0 %1079
    %1083 = vset.pattern.permute.xlu0 0
    %1084 = vperm.xlu0 %1083, %v978
    %v1085 = vpop.permute.xlu0 %1084
    %1088 = vset.pattern.permute.xlu0 0
    %1089 = vperm.xlu0 %1088, %v979
    %v1090 = vpop.permute.xlu0 %1089
    %1093 = vset.pattern.permute.xlu0 0
    %1094 = vperm.xlu0 %1093, %v980
    %v1095 = vpop.permute.xlu0 %1094
    %1098 = vset.pattern.permute.xlu0 0
    %1099 = vperm.xlu0 %1098, %v981
    %v1100 = vpop.permute.xlu0 %1099
    %1103 = vset.pattern.permute.xlu0 0
    %1104 = vperm.xlu0 %1103, %v982
    %v1105 = vpop.permute.xlu0 %1104
    %1108 = vset.pattern.permute.xlu0 0
    %1109 = vperm.xlu0 %1108, %v983
    %v1110 = vpop.permute.xlu0 %1109
    %1113 = vset.pattern.permute.xlu0 0
    %1114 = vperm.xlu0 %1113, %v984
    %v1115 = vpop.permute.xlu0 %1114
    %1118 = vset.pattern.permute.xlu0 0
    %1119 = vperm.xlu0 %1118, %v985
    %v1120 = vpop.permute.xlu0 %1119
    %1123 = vset.pattern.permute.xlu0 0
    %1124 = vperm.xlu0 %1123, %v986
    %v1125 = vpop.permute.xlu0 %1124
    %1128 = vset.pattern.permute.xlu0 0
    %1129 = vperm.xlu0 %1128, %v987
    %v1130 = vpop.permute.xlu0 %1129
    %1133 = vset.pattern.permute.xlu0 0
    %1134 = vperm.xlu0 %1133, %v988
    %v1135 = vpop.permute.xlu0 %1134
    %1138 = vset.pattern.permute.xlu0 0
    %1139 = vperm.xlu0 %1138, %v989
    %v1140 = vpop.permute.xlu0 %1139
    %1143 = vset.pattern.permute.xlu0 0
    %1144 = vperm.xlu0 %1143, %v990
    %v1145 = vpop.permute.xlu0 %1144
    %1148 = vset.pattern.permute.xlu0 0
    %1149 = vperm.xlu0 %1148, %v991
    %v1150 = vpop.permute.xlu0 %1149
    %v1152 = vmin.f32 %v928, %v995
    %v1153 = vmin.f32 %v929, %v1000
    %v1154 = vmin.f32 %v930, %v1005
    %v1155 = vmin.f32 %v931, %v1010
    %v1156 = vmin.f32 %v932, %v1015
    %v1157 = vmin.f32 %v933, %v1020
    %v1158 = vmin.f32 %v934, %v1025
    %v1159 = vmin.f32 %v935, %v1030
    %v1160 = vmin.f32 %v936, %v1035
    %v1161 = vmin.f32 %v937, %v1040
    %v1162 = vmin.f32 %v938, %v1045
    %v1163 = vmin.f32 %v939, %v1050
    %v1164 = vmin.f32 %v940, %v1055
    %v1165 = vmin.f32 %v941, %v1060
    %v1166 = vmin.f32 %v942, %v1065
    %v1167 = vmin.f32 %v943, %v1070
    %v1168 = vmin.f32 %v944, %v1075
    %v1169 = vmin.f32 %v945, %v1080
    %v1170 = vmin.f32 %v946, %v1085
    %v1171 = vmin.f32 %v947, %v1090
    %v1172 = vmin.f32 %v948, %v1095
    %v1173 = vmin.f32 %v949, %v1100
    %v1174 = vmin.f32 %v950, %v1105
    %v1175 = vmin.f32 %v951, %v1110
    %v1176 = vmin.f32 %v952, %v1115
    %v1177 = vmin.f32 %v953, %v1120
    %v1178 = vmin.f32 %v954, %v1125
    %v1179 = vmin.f32 %v955, %v1130
    %v1180 = vmin.f32 %v956, %v1135
    %v1181 = vmin.f32 %v957, %v1140
    %v1182 = vmin.f32 %v958, %v1145
    %v1183 = vmin.f32 %v959, %v1150
    %v1184 = vsel %vm704, %v1152, %v375
    %v1185 = vsel %vm705, %v1153, %v380
    %v1186 = vsel %vm706, %v1154, %v385
    %v1187 = vsel %vm707, %v1155, %v390
    %v1188 = vsel %vm708, %v1156, %v395
    %v1189 = vsel %vm709, %v1157, %v400
    %v1190 = vsel %vm710, %v1158, %v405
    %v1191 = vsel %vm711, %v1159, %v410
    %v1192 = vsel %vm712, %v1160, %v415
    %v1193 = vsel %vm713, %v1161, %v420
    %v1194 = vsel %vm714, %v1162, %v425
    %v1195 = vsel %vm715, %v1163, %v430
    %v1196 = vsel %vm716, %v1164, %v435
    %v1197 = vsel %vm717, %v1165, %v440
    %v1198 = vsel %vm718, %v1166, %v445
    %v1199 = vsel %vm719, %v1167, %v450
    %v1200 = vsel %vm720, %v1168, %v455
    %v1201 = vsel %vm721, %v1169, %v460
    %v1202 = vsel %vm722, %v1170, %v465
    %v1203 = vsel %vm723, %v1171, %v470
    %v1204 = vsel %vm724, %v1172, %v475
    %v1205 = vsel %vm725, %v1173, %v480
    %v1206 = vsel %vm726, %v1174, %v485
    %v1207 = vsel %vm727, %v1175, %v490
    %v1208 = vsel %vm728, %v1176, %v495
    %v1209 = vsel %vm729, %v1177, %v500
    %v1210 = vsel %vm730, %v1178, %v505
    %v1211 = vsel %vm731, %v1179, %v510
    %v1212 = vsel %vm732, %v1180, %v515
    %v1213 = vsel %vm733, %v1181, %v520
    %v1214 = vsel %vm734, %v1182, %v525
    %v1215 = vsel %vm735, %v1183, %v530
    %1216 = vst.msk [vmem:[%s5] sm:$0xff] %vm533, %v1184
    %1217 = vst.msk [vmem:[%s5 + $0x8] sm:$0xff] %vm533, %v1185
    %1218 = vst.msk [vmem:[%s5 + $0x10] sm:$0xff] %vm533, %v1186
    %1219 = vst.msk [vmem:[%s5 + $0x18] sm:$0xff] %vm533, %v1187
    %1220 = vst.msk [vmem:[%s5 + $0x20] sm:$0xff] %vm533, %v1188
    %1221 = vst.msk [vmem:[%s5 + $0x28] sm:$0xff] %vm533, %v1189
    %1222 = vst.msk [vmem:[%s5 + $0x30] sm:$0xff] %vm533, %v1190
    %1223 = vst.msk [vmem:[%s5 + $0x38] sm:$0xff] %vm533, %v1191
    %1224 = vst.msk [vmem:[%s5 + $0x40] sm:$0xff] %vm533, %v1192
    %1225 = vst.msk [vmem:[%s5 + $0x48] sm:$0xff] %vm533, %v1193
    %1226 = vst.msk [vmem:[%s5 + $0x50] sm:$0xff] %vm533, %v1194
    %1227 = vst.msk [vmem:[%s5 + $0x58] sm:$0xff] %vm533, %v1195
    %1228 = vst.msk [vmem:[%s5 + $0x60] sm:$0xff] %vm533, %v1196
    %1229 = vst.msk [vmem:[%s5 + $0x68] sm:$0xff] %vm533, %v1197
    %1230 = vst.msk [vmem:[%s5 + $0x70] sm:$0xff] %vm533, %v1198
    %1231 = vst.msk [vmem:[%s5 + $0x78] sm:$0xff] %vm533, %v1199
    %1232 = vst.msk [vmem:[%s5 + $0x80] sm:$0xff] %vm533, %v1200
    %1233 = vst.msk [vmem:[%s5 + $0x88] sm:$0xff] %vm533, %v1201
    %1234 = vst.msk [vmem:[%s5 + $0x90] sm:$0xff] %vm533, %v1202
    %1235 = vst.msk [vmem:[%s5 + $0x98] sm:$0xff] %vm533, %v1203
    %1236 = vst.msk [vmem:[%s5 + $0xa0] sm:$0xff] %vm533, %v1204
    %1237 = vst.msk [vmem:[%s5 + $0xa8] sm:$0xff] %vm533, %v1205
    %1238 = vst.msk [vmem:[%s5 + $0xb0] sm:$0xff] %vm533, %v1206
    %1239 = vst.msk [vmem:[%s5 + $0xb8] sm:$0xff] %vm533, %v1207
    %1240 = vst.msk [vmem:[%s5 + $0xc0] sm:$0xff] %vm533, %v1208
    %1241 = vst.msk [vmem:[%s5 + $0xc8] sm:$0xff] %vm533, %v1209
    %1242 = vst.msk [vmem:[%s5 + $0xd0] sm:$0xff] %vm533, %v1210
    %1243 = vst.msk [vmem:[%s5 + $0xd8] sm:$0xff] %vm533, %v1211
    %1244 = vst.msk [vmem:[%s5 + $0xe0] sm:$0xff] %vm533, %v1212
    %1245 = vst.msk [vmem:[%s5 + $0xe8] sm:$0xff] %vm533, %v1213
    %1246 = vst.msk [vmem:[%s5 + $0xf0] sm:$0xff] %vm533, %v1214
    %1247 = vst.msk [vmem:[%s5 + $0xf8] sm:$0xff] %vm533, %v1215
  $region25: #{tpu_custom_call.1} parent=0 // pred_fallthru
    _
  // Predicated region
  $region26: #{tpu_custom_call.1} parent=0 // pred_check
    _
  $region27: #{tpu_custom_call.1} parent=0 // pred_check_branch
    %1249 = sbr.rel (0) target = $region29
  $region28: #{tpu_custom_call.1} parent=0 // pred_region
    _
  $region29: #{tpu_custom_call.1} parent=0 // pred_fallthru
    _
  // Predicated region
  $region30: #{tpu_custom_call.1} parent=0 // pred_check
    _
  $region31: #{tpu_custom_call.1} parent=0 // pred_check_branch
    %1251 = sbr.rel (0) target = $region33
  $region32: #{tpu_custom_call.1} parent=0 // pred_region
    _
  $region33: #{tpu_custom_call.1} parent=0 // pred_fallthru
    _

</llo_original>
